<compile_context>
chip_gen: v6e
topology: v6e:2x2x1
jax: 0.10.0
libtpu: 0.0.40
codegen_flags: <defaults>
</compile_context>

<pallas_src>
import functools

import jax
import jax.numpy as jnp
from jax.experimental import pallas as pl
from jax.experimental.pallas import tpu as pltpu

_LANE = 128


def _nll2(c0, c1, label_is1, w0, w1, mask):
    """Two-column log-softmax + weighted-NLL partial sums (VPU/EUP only).

    mask is boolean; masked-out rows are excluded with jnp.where so NaN/Inf
    coming from padded tail rows can never pollute the sums.
    """
    m = jnp.maximum(c0, c1)
    lse = m + jnp.log(jnp.exp(c0 - m) + jnp.exp(c1 - m))
    picked = jnp.where(label_is1, c1 - lse, c0 - lse)
    w = jnp.where(label_is1, w1, w0)
    num = jnp.sum(jnp.where(mask, w * picked, 0.0))
    den = jnp.sum(jnp.where(mask, w, 0.0))
    return -num, den


def _cfair_kernel(hp, n, tn,
                  x_ref, ys_ref, wt_ref, wattr_ref,
                  w1_ref, b1_ref, w2_ref, b2_ref, w3_ref, b3_ref,
                  out_ref):
    f32 = jnp.float32
    bf16 = jnp.bfloat16

    # ---- row-validity mask for the (possibly partial) last tile ----
    row = jax.lax.broadcasted_iota(jnp.int32, (tn, 1), 0)
    valid = (pl.program_id(0) * tn + row) < n               # (tn, 1) bool

    x = x_ref[...].astype(bf16)                             # (tn, d)
    yy = ys_ref[:, 0:1]                                     # (tn, 1) i32
    ss = ys_ref[:, 1:2]                                     # (tn, 1) i32

    # ---- hidden layer: relu(x @ Wh + bh), single-pass bf16 MXU ----
    h = jnp.maximum(
        jnp.dot(x, w1_ref[...], preferred_element_type=f32) + b1_ref[...],
        0.0)                                                # (tn, hp) f32

    # ---- fused second layer: [adv0 hidden | adv1 hidden | classifier] ----
    z2 = (jnp.dot(h.astype(bf16), w2_ref[...], preferred_element_type=f32)
          + b2_ref[...])                                    # (tn, 2*hp+128)
    hj = jnp.maximum(z2[:, :2 * hp], 0.0)                   # (tn, 2*hp)

    # ---- classifier weighted-NLL partials ----
    loss_num, loss_den = _nll2(
        z2[:, 2 * hp:2 * hp + 1], z2[:, 2 * hp + 1:2 * hp + 2],
        yy == 1, wt_ref[0, 0], wt_ref[0, 1], valid)

    # ---- fused adversary output heads (block-diagonal) ----
    z3 = (jnp.dot(hj.astype(bf16), w3_ref[...], preferred_element_type=f32)
          + b3_ref[...])                                    # (tn, 128)
    ss_is1 = ss == 1
    adv = []
    for j in range(2):                  # num_classes = 2, static unroll
        mask_j = valid & (yy == j)
        nj, dj = _nll2(z3[:, 2 * j:2 * j + 1], z3[:, 2 * j + 1:2 * j + 2],
                       ss_is1, wattr_ref[j, 0], wattr_ref[j, 1], mask_j)
        adv.append((nj, dj))

    # ---- lane-dense partial-sum slab: sublane 0, lanes 0..5 ----
    lane = jax.lax.broadcasted_iota(jnp.int32, (1, _LANE), 1)
    vals = jnp.where(lane == 0, loss_num, 0.0)
    vals = jnp.where(lane == 1, loss_den, vals)
    vals = jnp.where(lane == 2, adv[0][0], vals)
    vals = jnp.where(lane == 3, adv[0][1], vals)
    vals = jnp.where(lane == 4, adv[1][0], vals)
    vals = jnp.where(lane == 5, adv[1][1], vals)
    sub = jax.lax.broadcasted_iota(jnp.int32, (8, _LANE), 0)
    out_ref[...] = jnp.where(sub == 0, vals, 0.0).astype(f32)


def cfair_forward(x, yy, ss1, wt, wattr, params, mu, tile_n=2048):
    """CFairNet forward (loss, mu*adv_loss) with a batch-tiled Pallas kernel.

    x:     (N, D) float32 (or bfloat16)
    yy:    (N, 1) int32   target labels {0,1}
    ss1:   (N, 1) int32   sensitive labels {0,1} (ss[:, 1] in the torch code)
    wt:    (1, 2) float32 reweight_target_tensor
    wattr: (2, 2) float32 stacked reweight_attr_tensors
    """
    wh, bh, ws, bs, wa, ba, wsc, bsc = params
    n, d = x.shape
    h_dim = wh.shape[1]

    def _rup(v, m):
        return -(-v // m) * m

    hp = max(_LANE, _rup(h_dim, _LANE))
    bf16 = jnp.bfloat16
    f32 = jnp.float32

    # ---- host-side weight packing (one-time, tiny); bf16 MXU operands ----
    w1 = jnp.zeros((d, hp), bf16).at[:, :h_dim].set(wh.astype(bf16))
    b1 = jnp.zeros((1, hp), f32).at[:, :h_dim].set(bh)

    w2 = jnp.zeros((hp, 2 * hp + _LANE), bf16)
    w2 = (w2.at[:h_dim, :h_dim].set(wa[0].astype(bf16))
            .at[:h_dim, hp:hp + h_dim].set(wa[1].astype(bf16))
            .at[:h_dim, 2 * hp:2 * hp + 2].set(ws.astype(bf16)))
    b2 = jnp.zeros((1, 2 * hp + _LANE), f32)
    b2 = (b2.at[:, :h_dim].set(ba[0])
            .at[:, hp:hp + h_dim].set(ba[1])
            .at[:, 2 * hp:2 * hp + 2].set(bs))

    w3 = jnp.zeros((2 * hp, _LANE), bf16)
    w3 = (w3.at[:h_dim, 0:2].set(wsc[0].astype(bf16))
            .at[hp:hp + h_dim, 2:4].set(wsc[1].astype(bf16)))
    b3 = jnp.zeros((1, _LANE), f32)
    b3 = b3.at[:, 0:2].set(bsc[0]).at[:, 2:4].set(bsc[1])

    # ---- labels: one (n, 2) int32 array -> one small per-step DMA ----
    ys = jnp.concatenate(
        [yy.reshape(n, 1).astype(jnp.int32),
         ss1.reshape(n, 1).astype(jnp.int32)], axis=1)

    # ---- tile size: multiple of 8; keep >= 2 tiles when possible (v7x
    #      megacore); shrink until the per-step footprint fits the budget ----
    tn = min(max(8, _rup(tile_n, 8)), max(8, _rup(-(-n // 2), 8)))

    def _vmem_bytes(t):
        per_row = (2 * d * 4            # x tile, double-buffered (f32)
                   + 2 * _LANE * 4      # ys tile, lane-padded, double-buffered
                   + 4 * (hp + (2 * hp + _LANE) + 2 * hp + _LANE + 2 * _LANE))
        wts = 2 * (2 * (d * hp + hp * (2 * hp + _LANE) + 2 * hp * _LANE)
                   + 4 * (hp + (2 * hp + _LANE) + _LANE))
        return t * per_row + wts + 2 * 8 * _LANE * 4 + (2 << 20)

    budget = 36 * 1024 * 1024           # headroom for v7x's 64 MiB VMEM/TC
    while tn > 8 and _vmem_bytes(tn) > budget:
        tn = max(8, _rup(tn // 2, 8))

    num_tiles = -(-n // tn)

    smem = pltpu.MemorySpace.SMEM
    in_specs = [
        pl.BlockSpec((tn, d), lambda i: (i, 0)),   # x tile (no host pad copy)
        pl.BlockSpec((tn, 2), lambda i: (i, 0)),   # [yy | ss] tile
        pl.BlockSpec(wt.shape, lambda i: (0, 0), memory_space=smem),
        pl.BlockSpec(wattr.shape, lambda i: (0, 0), memory_space=smem),
        pl.BlockSpec(w1.shape, lambda i: (0, 0)),  # resident weights/biases
        pl.BlockSpec(b1.shape, lambda i: (0, 0)),
        pl.BlockSpec(w2.shape, lambda i: (0, 0)),
        pl.BlockSpec(b2.shape, lambda i: (0, 0)),
        pl.BlockSpec(w3.shape, lambda i: (0, 0)),
        pl.BlockSpec(b3.shape, lambda i: (0, 0)),
    ]
    out_spec = pl.BlockSpec((8, _LANE), lambda i: (i, 0))

    partials = pl.pallas_call(
        functools.partial(_cfair_kernel, hp, n, tn),
        grid=(num_tiles,),
        in_specs=in_specs,
        out_specs=out_spec,
        out_shape=jax.ShapeDtypeStruct((num_tiles * 8, _LANE), f32),
        compiler_params=pltpu.CompilerParams(
            dimension_semantics=("parallel",),
            vmem_limit_bytes=48 * 1024 * 1024),
    )(x, ys, wt.astype(f32), wattr.astype(f32),
      w1, b1, w2, b2, w3, b3)

    # ---- finalize outside the kernel (global num/den -> safe with tiling).
    #      If a class j has no rows in the batch, the adversary term is NaN,
    #      matching the PyTorch semantics (empty nll_loss).
    totals = jnp.sum(partials, axis=0)          # (128,) lanes 0..5 hold partials
    loss = totals[0] / totals[1]
    adv = 0.5 * (totals[2] / totals[3] + totals[4] / totals[5])
    return loss, mu * adv


def _reference(x, yy, ss1, wt, wattr, params, mu, mxu_dtype=None):
    """Pure-JAX reference mirroring the PyTorch forward.

    mxu_dtype=None  -> f32 HIGHEST (PyTorch-equivalent math).
    mxu_dtype=bf16  -> mirrors the kernel's bf16 MXU operands exactly.
    """
    wh, bh, ws, bs, wa, ba, wsc, bsc = params
    if mxu_dtype is None:
        dot = lambda a, b: jnp.dot(a, b, precision=jax.lax.Precision.HIGHEST)
    else:
        dot = lambda a, b: jnp.dot(a.astype(mxu_dtype), b.astype(mxu_dtype),
                                   preferred_element_type=jnp.float32)
    h = jax.nn.relu(dot(x, wh) + bh)
    logprobs = jax.nn.log_softmax(dot(h, ws) + bs, axis=1)
    yyf = yy[:, 0]
    w_y = wt[0, yyf]
    loss = -jnp.sum(w_y * logprobs[jnp.arange(x.shape[0]), yyf]) / jnp.sum(w_y)
    advs = []
    for j in range(2):
        hj = jax.nn.relu(dot(h, wa[j]) + ba[j])
        lpj = jax.nn.log_softmax(dot(hj, wsc[j]) + bsc[j], axis=1)
        mask = (yyf == j).astype(jnp.float32)
        sf = ss1[:, 0]
        w_s = wattr[j, sf]
        picked = lpj[jnp.arange(x.shape[0]), sf]
        advs.append(-jnp.sum(mask * w_s * picked) / jnp.sum(mask * w_s))
    return loss, mu * (advs[0] + advs[1]) / 2.0


if __name__ == "__main__":
    N, D, H, C = 8, 16, 32, 2
    MU = 100.0

    key = jax.random.PRNGKey(0)
    keys = jax.random.split(key, 12)

    x = jax.random.normal(keys[0], (N, D), dtype=jnp.float32)
    yy = jnp.array([0, 1, 0, 1, 1, 0, 0, 1], dtype=jnp.int32).reshape(N, 1)
    ss_full = jax.nn.one_hot(
        jax.random.bernoulli(keys[1], 0.5, (N,)).astype(jnp.int32), 2,
        dtype=jnp.float32)                                  # (N, 2) like torch ss
    ss1 = ss_full[:, 1:2].astype(jnp.int32)                 # ss[:, 1].long()

    wt = jnp.array([[1.0, 2.0]], dtype=jnp.float32)         # reweight_target_tensor
    wattr = jnp.array([[1.5, 0.5],
                       [0.8, 1.2]], dtype=jnp.float32)      # reweight_attr_tensors

    scale = 0.1
    params = (
        scale * jax.random.normal(keys[2], (D, H), dtype=jnp.float32),    # Wh
        scale * jax.random.normal(keys[3], (1, H), dtype=jnp.float32),    # bh
        scale * jax.random.normal(keys[4], (H, C), dtype=jnp.float32),    # Ws
        scale * jax.random.normal(keys[5], (1, C), dtype=jnp.float32),    # bs
        scale * jax.random.normal(keys[6], (C, H, H), dtype=jnp.float32), # Wa (per class)
        scale * jax.random.normal(keys[7], (C, 1, H), dtype=jnp.float32), # ba
        scale * jax.random.normal(keys[8], (C, H, C), dtype=jnp.float32), # Wsc
        scale * jax.random.normal(keys[9], (C, 1, C), dtype=jnp.float32), # bsc
    )

    loss, adv = cfair_forward(x, yy, ss1, wt, wattr, params, MU)
    jax.block_until_ready((loss, adv))

    # Tight check against a reference that mirrors the kernel's bf16 MXU path.
    bf_loss, bf_adv = _reference(x, yy, ss1, wt, wattr, params, MU,
                                 mxu_dtype=jnp.bfloat16)
    assert jnp.allclose(loss, bf_loss, atol=1e-4, rtol=1e-4), (loss, bf_loss)
    assert jnp.allclose(adv, bf_adv, atol=1e-3, rtol=1e-4), (adv, bf_adv)

    # Looser check against the f32 (PyTorch-equivalent) reference: the only
    # deviation is the bf16 MXU operand rounding.
    ref_loss, ref_adv = _reference(x, yy, ss1, wt, wattr, params, MU)
    assert jnp.allclose(loss, ref_loss, atol=2e-2, rtol=2e-2), (loss, ref_loss)
    assert jnp.allclose(adv, ref_adv, atol=2e-2, rtol=2e-2), (adv, ref_adv)

    print("KERNEL_OK")
</pallas_src>

<mosaic_0001>
module attributes {stable_mosaic.version = 11 : i64} {
  func.func @_cfair_kernel(%arg0: i32, %arg1: memref<8x16xf32, #tpu.memory_space<vmem>>, %arg2: memref<8x2xi32, #tpu.memory_space<vmem>>, %arg3: memref<1x2xf32, #tpu.memory_space<smem>>, %arg4: memref<2x2xf32, #tpu.memory_space<smem>>, %arg5: memref<16x128xbf16, #tpu.memory_space<vmem>>, %arg6: memref<1x128xf32, #tpu.memory_space<vmem>>, %arg7: memref<128x384xbf16, #tpu.memory_space<vmem>>, %arg8: memref<1x384xf32, #tpu.memory_space<vmem>>, %arg9: memref<256x128xbf16, #tpu.memory_space<vmem>>, %arg10: memref<1x128xf32, #tpu.memory_space<vmem>>, %arg11: memref<8x128xf32, #tpu.memory_space<vmem>>) attributes {dimension_semantics = [#tpu.dimension_semantics<parallel>], iteration_bounds = array<i64: 1>, scalar_prefetch = 0 : i64, scratch_operands = 0 : i64, tpu.core_type = #tpu.core_type<tc>, window_params = [{transform_indices = @transform_0, window_bounds = array<i64: 8, 16>}, {transform_indices = @transform_1, window_bounds = array<i64: 8, 2>}, {transform_indices = @transform_2, window_bounds = array<i64: 1, 2>}, {transform_indices = @transform_3, window_bounds = array<i64: 2, 2>}, {pipeline_mode = #tpu.pipeline_mode<synchronous>, transform_indices = @transform_4, window_bounds = array<i64: 16, 128>}, {pipeline_mode = #tpu.pipeline_mode<synchronous>, transform_indices = @transform_5, window_bounds = array<i64: 1, 128>}, {pipeline_mode = #tpu.pipeline_mode<synchronous>, transform_indices = @transform_6, window_bounds = array<i64: 128, 384>}, {pipeline_mode = #tpu.pipeline_mode<synchronous>, transform_indices = @transform_7, window_bounds = array<i64: 1, 384>}, {pipeline_mode = #tpu.pipeline_mode<synchronous>, transform_indices = @transform_8, window_bounds = array<i64: 256, 128>}, {pipeline_mode = #tpu.pipeline_mode<synchronous>, transform_indices = @transform_9, window_bounds = array<i64: 1, 128>}, {transform_indices = @transform_10, window_bounds = array<i64: 8, 128>}]} {
    %0 = tpu.iota {dimensions = array<i32: 0>} : vector<8x1xi32>
    %c8_i32 = arith.constant 8 : i32
    %1 = arith.muli %arg0, %c8_i32 : i32
    %2 = vector.broadcast %1 : i32 to vector<8x1xi32>
    %3 = arith.addi %2, %0 : vector<8x1xi32>
    %c8_i32_0 = arith.constant 8 : i32
    %4 = vector.broadcast %c8_i32_0 : i32 to vector<8x1xi32>
    %5 = arith.cmpi slt, %3, %4 : vector<8x1xi32>
    %c0 = arith.constant 0 : index
    %c0_1 = arith.constant 0 : index
    %6 = vector.load %arg1[%c0, %c0_1] : memref<8x16xf32, #tpu.memory_space<vmem>>, vector<8x16xf32>
    %7 = arith.truncf %6 : vector<8x16xf32> to vector<8x16xbf16>
    %c0_2 = arith.constant 0 : index
    %c0_3 = arith.constant 0 : index
    %8 = vector.load %arg2[%c0_2, %c0_3] : memref<8x2xi32, #tpu.memory_space<vmem>>, vector<8x1xi32>
    %c0_4 = arith.constant 0 : index
    %c1 = arith.constant 1 : index
    %9 = vector.load %arg2[%c0_4, %c1] : memref<8x2xi32, #tpu.memory_space<vmem>>, vector<8x1xi32>
    %c0_5 = arith.constant 0 : index
    %c0_6 = arith.constant 0 : index
    %10 = vector.load %arg5[%c0_5, %c0_6] : memref<16x128xbf16, #tpu.memory_space<vmem>>, vector<16x128xbf16>
    %cst = arith.constant dense<0.000000e+00> : vector<8x128xf32>
    %11 = tpu.matmul %7, %10, %cst {dimension_numbers = #tpu.dot_dimension_numbers<[1], [0], [0], [1], [0, 0, 1, 1], [], []>} : vector<8x16xbf16>, vector<16x128xbf16>, vector<8x128xf32> -> vector<8x128xf32>
    %c0_7 = arith.constant 0 : index
    %c0_8 = arith.constant 0 : index
    %12 = vector.load %arg6[%c0_7, %c0_8] : memref<1x128xf32, #tpu.memory_space<vmem>>, vector<1x128xf32>
    %13 = vector.broadcast %12 : vector<1x128xf32> to vector<8x128xf32>
    %14 = arith.addf %11, %13 : vector<8x128xf32>
    %cst_9 = arith.constant 0.000000e+00 : f32
    %15 = vector.broadcast %cst_9 : f32 to vector<8x128xf32>
    %16 = arith.maximumf %14, %15 : vector<8x128xf32>
    %17 = arith.truncf %16 : vector<8x128xf32> to vector<8x128xbf16>
    %c0_10 = arith.constant 0 : index
    %c0_11 = arith.constant 0 : index
    %18 = vector.load %arg7[%c0_10, %c0_11] : memref<128x384xbf16, #tpu.memory_space<vmem>>, vector<128x384xbf16>
    %cst_12 = arith.constant dense<0.000000e+00> : vector<8x384xf32>
    %19 = tpu.matmul %17, %18, %cst_12 {dimension_numbers = #tpu.dot_dimension_numbers<[1], [0], [0], [1], [0, 0, 1, 1], [], []>} : vector<8x128xbf16>, vector<128x384xbf16>, vector<8x384xf32> -> vector<8x384xf32>
    %c0_13 = arith.constant 0 : index
    %c0_14 = arith.constant 0 : index
    %20 = vector.load %arg8[%c0_13, %c0_14] : memref<1x384xf32, #tpu.memory_space<vmem>>, vector<1x384xf32>
    %21 = vector.broadcast %20 : vector<1x384xf32> to vector<8x384xf32>
    %22 = arith.addf %19, %21 : vector<8x384xf32>
    %23 = vector.extract_strided_slice %22 {offsets = [0, 0], sizes = [8, 256], strides = [1, 1]} : vector<8x384xf32> to vector<8x256xf32>
    %cst_15 = arith.constant 0.000000e+00 : f32
    %24 = vector.broadcast %cst_15 : f32 to vector<8x256xf32>
    %25 = arith.maximumf %23, %24 : vector<8x256xf32>
    %26 = vector.extract_strided_slice %22 {offsets = [0, 256], sizes = [8, 1], strides = [1, 1]} : vector<8x384xf32> to vector<8x1xf32>
    %27 = vector.extract_strided_slice %22 {offsets = [0, 257], sizes = [8, 1], strides = [1, 1]} : vector<8x384xf32> to vector<8x1xf32>
    %c1_i32 = arith.constant 1 : i32
    %28 = vector.broadcast %c1_i32 : i32 to vector<8x1xi32>
    %29 = arith.cmpi eq, %8, %28 : vector<8x1xi32>
    %c0_16 = arith.constant 0 : index
    %c0_17 = arith.constant 0 : index
    %30 = memref.load %arg3[%c0_16, %c0_17] : memref<1x2xf32, #tpu.memory_space<smem>>
    %c0_18 = arith.constant 0 : index
    %c1_19 = arith.constant 1 : index
    %31 = memref.load %arg3[%c0_18, %c1_19] : memref<1x2xf32, #tpu.memory_space<smem>>
    %32 = arith.maximumf %26, %27 : vector<8x1xf32>
    %33 = arith.subf %26, %32 : vector<8x1xf32>
    %34 = math.exp %33 : vector<8x1xf32>
    %35 = arith.subf %27, %32 : vector<8x1xf32>
    %36 = math.exp %35 : vector<8x1xf32>
    %37 = arith.addf %34, %36 : vector<8x1xf32>
    %38 = math.log %37 : vector<8x1xf32>
    %39 = arith.addf %32, %38 : vector<8x1xf32>
    %40 = arith.subf %27, %39 : vector<8x1xf32>
    %41 = arith.subf %26, %39 : vector<8x1xf32>
    %42 = arith.select %29, %40, %41 : vector<8x1xi1>, vector<8x1xf32>
    %43 = vector.broadcast %31 : f32 to vector<8x1xf32>
    %44 = vector.broadcast %30 : f32 to vector<8x1xf32>
    %45 = arith.select %29, %43, %44 : vector<8x1xi1>, vector<8x1xf32>
    %46 = arith.mulf %45, %42 : vector<8x1xf32>
    %cst_20 = arith.constant 0.000000e+00 : f32
    %47 = vector.broadcast %cst_20 : f32 to vector<8x1xf32>
    %48 = arith.select %5, %46, %47 : vector<8x1xi1>, vector<8x1xf32>
    %49 = vector.shape_cast %48 : vector<8x1xf32> to vector<1x8x1xf32>
    %cst_21 = arith.constant dense<0.000000e+00> : vector<1xf32>
    %50 = vector.multi_reduction <add>, %49, %cst_21 [1, 2] : vector<1x8x1xf32> to vector<1xf32>
    %51 = vector.shape_cast %50 : vector<1xf32> to vector<1x1x1xf32>
    %52 = vector.extract %51[0, 0, 0] : f32 from vector<1x1x1xf32>
    %cst_22 = arith.constant 0.000000e+00 : f32
    %53 = vector.broadcast %cst_22 : f32 to vector<8x1xf32>
    %54 = arith.select %5, %45, %53 : vector<8x1xi1>, vector<8x1xf32>
    %55 = vector.shape_cast %54 : vector<8x1xf32> to vector<1x8x1xf32>
    %cst_23 = arith.constant dense<0.000000e+00> : vector<1xf32>
    %56 = vector.multi_reduction <add>, %55, %cst_23 [1, 2] : vector<1x8x1xf32> to vector<1xf32>
    %57 = vector.shape_cast %56 : vector<1xf32> to vector<1x1x1xf32>
    %58 = vector.extract %57[0, 0, 0] : f32 from vector<1x1x1xf32>
    %cst_24 = arith.constant 0.000000e+00 : f32
    %59 = arith.subf %cst_24, %52 : f32
    %60 = arith.truncf %25 : vector<8x256xf32> to vector<8x256xbf16>
    %c0_25 = arith.constant 0 : index
    %c0_26 = arith.constant 0 : index
    %61 = vector.load %arg9[%c0_25, %c0_26] : memref<256x128xbf16, #tpu.memory_space<vmem>>, vector<256x128xbf16>
    %cst_27 = arith.constant dense<0.000000e+00> : vector<8x128xf32>
    %62 = tpu.matmul %60, %61, %cst_27 {dimension_numbers = #tpu.dot_dimension_numbers<[1], [0], [0], [1], [0, 0, 1, 1], [], []>} : vector<8x256xbf16>, vector<256x128xbf16>, vector<8x128xf32> -> vector<8x128xf32>
    %c0_28 = arith.constant 0 : index
    %c0_29 = arith.constant 0 : index
    %63 = vector.load %arg10[%c0_28, %c0_29] : memref<1x128xf32, #tpu.memory_space<vmem>>, vector<1x128xf32>
    %64 = vector.broadcast %63 : vector<1x128xf32> to vector<8x128xf32>
    %65 = arith.addf %62, %64 : vector<8x128xf32>
    %c1_i32_30 = arith.constant 1 : i32
    %66 = vector.broadcast %c1_i32_30 : i32 to vector<8x1xi32>
    %67 = arith.cmpi eq, %9, %66 : vector<8x1xi32>
    %c0_i32 = arith.constant 0 : i32
    %68 = vector.broadcast %c0_i32 : i32 to vector<8x1xi32>
    %69 = arith.cmpi eq, %8, %68 : vector<8x1xi32>
    %70 = arith.andi %5, %69 : vector<8x1xi1>
    %71 = vector.extract_strided_slice %65 {offsets = [0, 0], sizes = [8, 1], strides = [1, 1]} : vector<8x128xf32> to vector<8x1xf32>
    %72 = vector.extract_strided_slice %65 {offsets = [0, 1], sizes = [8, 1], strides = [1, 1]} : vector<8x128xf32> to vector<8x1xf32>
    %c0_31 = arith.constant 0 : index
    %c0_32 = arith.constant 0 : index
    %73 = memref.load %arg4[%c0_31, %c0_32] : memref<2x2xf32, #tpu.memory_space<smem>>
    %c0_33 = arith.constant 0 : index
    %c1_34 = arith.constant 1 : index
    %74 = memref.load %arg4[%c0_33, %c1_34] : memref<2x2xf32, #tpu.memory_space<smem>>
    %75 = arith.maximumf %71, %72 : vector<8x1xf32>
    %76 = arith.subf %71, %75 : vector<8x1xf32>
    %77 = math.exp %76 : vector<8x1xf32>
    %78 = arith.subf %72, %75 : vector<8x1xf32>
    %79 = math.exp %78 : vector<8x1xf32>
    %80 = arith.addf %77, %79 : vector<8x1xf32>
    %81 = math.log %80 : vector<8x1xf32>
    %82 = arith.addf %75, %81 : vector<8x1xf32>
    %83 = arith.subf %72, %82 : vector<8x1xf32>
    %84 = arith.subf %71, %82 : vector<8x1xf32>
    %85 = arith.select %67, %83, %84 : vector<8x1xi1>, vector<8x1xf32>
    %86 = vector.broadcast %74 : f32 to vector<8x1xf32>
    %87 = vector.broadcast %73 : f32 to vector<8x1xf32>
    %88 = arith.select %67, %86, %87 : vector<8x1xi1>, vector<8x1xf32>
    %89 = arith.mulf %88, %85 : vector<8x1xf32>
    %cst_35 = arith.constant 0.000000e+00 : f32
    %90 = vector.broadcast %cst_35 : f32 to vector<8x1xf32>
    %91 = arith.select %70, %89, %90 : vector<8x1xi1>, vector<8x1xf32>
    %92 = vector.shape_cast %91 : vector<8x1xf32> to vector<1x8x1xf32>
    %cst_36 = arith.constant dense<0.000000e+00> : vector<1xf32>
    %93 = vector.multi_reduction <add>, %92, %cst_36 [1, 2] : vector<1x8x1xf32> to vector<1xf32>
    %94 = vector.shape_cast %93 : vector<1xf32> to vector<1x1x1xf32>
    %95 = vector.extract %94[0, 0, 0] : f32 from vector<1x1x1xf32>
    %cst_37 = arith.constant 0.000000e+00 : f32
    %96 = vector.broadcast %cst_37 : f32 to vector<8x1xf32>
    %97 = arith.select %70, %88, %96 : vector<8x1xi1>, vector<8x1xf32>
    %98 = vector.shape_cast %97 : vector<8x1xf32> to vector<1x8x1xf32>
    %cst_38 = arith.constant dense<0.000000e+00> : vector<1xf32>
    %99 = vector.multi_reduction <add>, %98, %cst_38 [1, 2] : vector<1x8x1xf32> to vector<1xf32>
    %100 = vector.shape_cast %99 : vector<1xf32> to vector<1x1x1xf32>
    %101 = vector.extract %100[0, 0, 0] : f32 from vector<1x1x1xf32>
    %cst_39 = arith.constant 0.000000e+00 : f32
    %102 = arith.subf %cst_39, %95 : f32
    %c1_i32_40 = arith.constant 1 : i32
    %103 = vector.broadcast %c1_i32_40 : i32 to vector<8x1xi32>
    %104 = arith.cmpi eq, %8, %103 : vector<8x1xi32>
    %105 = arith.andi %5, %104 : vector<8x1xi1>
    %106 = vector.extract_strided_slice %65 {offsets = [0, 2], sizes = [8, 1], strides = [1, 1]} : vector<8x128xf32> to vector<8x1xf32>
    %107 = vector.extract_strided_slice %65 {offsets = [0, 3], sizes = [8, 1], strides = [1, 1]} : vector<8x128xf32> to vector<8x1xf32>
    %c1_41 = arith.constant 1 : index
    %c0_42 = arith.constant 0 : index
    %108 = memref.load %arg4[%c1_41, %c0_42] : memref<2x2xf32, #tpu.memory_space<smem>>
    %c1_43 = arith.constant 1 : index
    %c1_44 = arith.constant 1 : index
    %109 = memref.load %arg4[%c1_43, %c1_44] : memref<2x2xf32, #tpu.memory_space<smem>>
    %110 = arith.maximumf %106, %107 : vector<8x1xf32>
    %111 = arith.subf %106, %110 : vector<8x1xf32>
    %112 = math.exp %111 : vector<8x1xf32>
    %113 = arith.subf %107, %110 : vector<8x1xf32>
    %114 = math.exp %113 : vector<8x1xf32>
    %115 = arith.addf %112, %114 : vector<8x1xf32>
    %116 = math.log %115 : vector<8x1xf32>
    %117 = arith.addf %110, %116 : vector<8x1xf32>
    %118 = arith.subf %107, %117 : vector<8x1xf32>
    %119 = arith.subf %106, %117 : vector<8x1xf32>
    %120 = arith.select %67, %118, %119 : vector<8x1xi1>, vector<8x1xf32>
    %121 = vector.broadcast %109 : f32 to vector<8x1xf32>
    %122 = vector.broadcast %108 : f32 to vector<8x1xf32>
    %123 = arith.select %67, %121, %122 : vector<8x1xi1>, vector<8x1xf32>
    %124 = arith.mulf %123, %120 : vector<8x1xf32>
    %cst_45 = arith.constant 0.000000e+00 : f32
    %125 = vector.broadcast %cst_45 : f32 to vector<8x1xf32>
    %126 = arith.select %105, %124, %125 : vector<8x1xi1>, vector<8x1xf32>
    %127 = vector.shape_cast %126 : vector<8x1xf32> to vector<1x8x1xf32>
    %cst_46 = arith.constant dense<0.000000e+00> : vector<1xf32>
    %128 = vector.multi_reduction <add>, %127, %cst_46 [1, 2] : vector<1x8x1xf32> to vector<1xf32>
    %129 = vector.shape_cast %128 : vector<1xf32> to vector<1x1x1xf32>
    %130 = vector.extract %129[0, 0, 0] : f32 from vector<1x1x1xf32>
    %cst_47 = arith.constant 0.000000e+00 : f32
    %131 = vector.broadcast %cst_47 : f32 to vector<8x1xf32>
    %132 = arith.select %105, %123, %131 : vector<8x1xi1>, vector<8x1xf32>
    %133 = vector.shape_cast %132 : vector<8x1xf32> to vector<1x8x1xf32>
    %cst_48 = arith.constant dense<0.000000e+00> : vector<1xf32>
    %134 = vector.multi_reduction <add>, %133, %cst_48 [1, 2] : vector<1x8x1xf32> to vector<1xf32>
    %135 = vector.shape_cast %134 : vector<1xf32> to vector<1x1x1xf32>
    %136 = vector.extract %135[0, 0, 0] : f32 from vector<1x1x1xf32>
    %cst_49 = arith.constant 0.000000e+00 : f32
    %137 = arith.subf %cst_49, %130 : f32
    %138 = tpu.iota {dimensions = array<i32: 1>} : vector<1x128xi32>
    %c0_i32_50 = arith.constant 0 : i32
    %139 = vector.broadcast %c0_i32_50 : i32 to vector<1x128xi32>
    %140 = arith.cmpi eq, %138, %139 : vector<1x128xi32>
    %cst_51 = arith.constant 0.000000e+00 : f32
    %141 = vector.broadcast %59 : f32 to vector<1x128xf32>
    %142 = vector.broadcast %cst_51 : f32 to vector<1x128xf32>
    %143 = arith.select %140, %141, %142 : vector<1x128xi1>, vector<1x128xf32>
    %c1_i32_52 = arith.constant 1 : i32
    %144 = vector.broadcast %c1_i32_52 : i32 to vector<1x128xi32>
    %145 = arith.cmpi eq, %138, %144 : vector<1x128xi32>
    %146 = vector.broadcast %58 : f32 to vector<1x128xf32>
    %147 = arith.select %145, %146, %143 : vector<1x128xi1>, vector<1x128xf32>
    %c2_i32 = arith.constant 2 : i32
    %148 = vector.broadcast %c2_i32 : i32 to vector<1x128xi32>
    %149 = arith.cmpi eq, %138, %148 : vector<1x128xi32>
    %150 = vector.broadcast %102 : f32 to vector<1x128xf32>
    %151 = arith.select %149, %150, %147 : vector<1x128xi1>, vector<1x128xf32>
    %c3_i32 = arith.constant 3 : i32
    %152 = vector.broadcast %c3_i32 : i32 to vector<1x128xi32>
    %153 = arith.cmpi eq, %138, %152 : vector<1x128xi32>
    %154 = vector.broadcast %101 : f32 to vector<1x128xf32>
    %155 = arith.select %153, %154, %151 : vector<1x128xi1>, vector<1x128xf32>
    %c4_i32 = arith.constant 4 : i32
    %156 = vector.broadcast %c4_i32 : i32 to vector<1x128xi32>
    %157 = arith.cmpi eq, %138, %156 : vector<1x128xi32>
    %158 = vector.broadcast %137 : f32 to vector<1x128xf32>
    %159 = arith.select %157, %158, %155 : vector<1x128xi1>, vector<1x128xf32>
    %c5_i32 = arith.constant 5 : i32
    %160 = vector.broadcast %c5_i32 : i32 to vector<1x128xi32>
    %161 = arith.cmpi eq, %138, %160 : vector<1x128xi32>
    %162 = vector.broadcast %136 : f32 to vector<1x128xf32>
    %163 = arith.select %161, %162, %159 : vector<1x128xi1>, vector<1x128xf32>
    %164 = tpu.iota {dimensions = array<i32: 0>} : vector<8x128xi32>
    %c0_i32_53 = arith.constant 0 : i32
    %165 = vector.broadcast %c0_i32_53 : i32 to vector<8x128xi32>
    %166 = arith.cmpi eq, %164, %165 : vector<8x128xi32>
    %cst_54 = arith.constant 0.000000e+00 : f32
    %167 = vector.shape_cast %163 : vector<1x128xf32> to vector<1x128xf32>
    %168 = vector.broadcast %167 : vector<1x128xf32> to vector<8x128xf32>
    %169 = vector.broadcast %cst_54 : f32 to vector<8x128xf32>
    %170 = arith.select %166, %168, %169 : vector<8x128xi1>, vector<8x128xf32>
    %c0_55 = arith.constant 0 : index
    %c0_56 = arith.constant 0 : index
    %171 = vector.load %arg11[%c0_55, %c0_56] : memref<8x128xf32, #tpu.memory_space<vmem>>, vector<8x128xf32>
    tpu.vector_store %arg11[%c0_55, %c0_56], %170 {strides = array<i32>} : memref<8x128xf32, #tpu.memory_space<vmem>>, vector<8x128xf32>,
    return
  }
  func.func @transform_0(%arg0: i32) -> (i32, i32) {
    %c0_i32 = arith.constant 0 : i32
    %c0_i32_0 = arith.constant 0 : i32
    return %arg0, %c0_i32 : i32, i32
  }
  func.func @transform_1(%arg0: i32) -> (i32, i32) {
    %c0_i32 = arith.constant 0 : i32
    %c0_i32_0 = arith.constant 0 : i32
    return %arg0, %c0_i32 : i32, i32
  }
  func.func @transform_2(%arg0: i32) -> (i32, i32) {
    %c0_i32 = arith.constant 0 : i32
    %c0_i32_0 = arith.constant 0 : i32
    %c0_i32_1 = arith.constant 0 : i32
    return %c0_i32, %c0_i32_0 : i32, i32
  }
  func.func @transform_3(%arg0: i32) -> (i32, i32) {
    %c0_i32 = arith.constant 0 : i32
    %c0_i32_0 = arith.constant 0 : i32
    %c0_i32_1 = arith.constant 0 : i32
    return %c0_i32, %c0_i32_0 : i32, i32
  }
  func.func @transform_4(%arg0: i32) -> (i32, i32) {
    %c0_i32 = arith.constant 0 : i32
    %c0_i32_0 = arith.constant 0 : i32
    %c0_i32_1 = arith.constant 0 : i32
    return %c0_i32, %c0_i32_0 : i32, i32
  }
  func.func @transform_5(%arg0: i32) -> (i32, i32) {
    %c0_i32 = arith.constant 0 : i32
    %c0_i32_0 = arith.constant 0 : i32
    %c0_i32_1 = arith.constant 0 : i32
    return %c0_i32, %c0_i32_0 : i32, i32
  }
  func.func @transform_6(%arg0: i32) -> (i32, i32) {
    %c0_i32 = arith.constant 0 : i32
    %c0_i32_0 = arith.constant 0 : i32
    %c0_i32_1 = arith.constant 0 : i32
    return %c0_i32, %c0_i32_0 : i32, i32
  }
  func.func @transform_7(%arg0: i32) -> (i32, i32) {
    %c0_i32 = arith.constant 0 : i32
    %c0_i32_0 = arith.constant 0 : i32
    %c0_i32_1 = arith.constant 0 : i32
    return %c0_i32, %c0_i32_0 : i32, i32
  }
  func.func @transform_8(%arg0: i32) -> (i32, i32) {
    %c0_i32 = arith.constant 0 : i32
    %c0_i32_0 = arith.constant 0 : i32
    %c0_i32_1 = arith.constant 0 : i32
    return %c0_i32, %c0_i32_0 : i32, i32
  }
  func.func @transform_9(%arg0: i32) -> (i32, i32) {
    %c0_i32 = arith.constant 0 : i32
    %c0_i32_0 = arith.constant 0 : i32
    %c0_i32_1 = arith.constant 0 : i32
    return %c0_i32, %c0_i32_0 : i32, i32
  }
  func.func @transform_10(%arg0: i32) -> (i32, i32) {
    %c0_i32 = arith.constant 0 : i32
    %c0_i32_0 = arith.constant 0 : i32
    return %arg0, %c0_i32 : i32, i32
  }
}

</mosaic_0001>

<llo_original>
// kernel: tpu_custom_call.1
$region0: #{tpu_custom_call.1}
  #allocation0 [shape = 'u32[]', space=smem, size = 0x4, offset = 0x4, fixed_abs, tag = 'smem constant byte address 0x4 - core index']
  #allocation1 [shape = 'u32[144,128]{1,0:T(1,128)}', space=vmem, size = 0x12000, scoped, tag = 'internal scratch']
  %s0 = inlined_call_operand.vmem [shape: f32[8,16], index: 0, kind: input, shape index: {}]
  %s1 = inlined_call_operand.vmem [shape: s32[8,2], index: 1, kind: input, shape index: {}]
  %s2 = inlined_call_operand.hbm [shape: f32[1,2], index: 2, kind: input, shape index: {}]
  %s3 = inlined_call_operand.hbm [shape: f32[2,2], index: 3, kind: input, shape index: {}]
  %s4 = inlined_call_operand.vmem [shape: bf16[16,128], index: 4, kind: input, shape index: {}]
  %s5 = inlined_call_operand.hbm [shape: f32[1,128], index: 5, kind: input, shape index: {}]
  %s6 = inlined_call_operand.hbm [shape: bf16[128,384], index: 6, kind: input, shape index: {}]
  %s7 = inlined_call_operand.vmem [shape: f32[1,384], index: 7, kind: input, shape index: {}]
  %s8 = inlined_call_operand.hbm [shape: bf16[256,128], index: 8, kind: input, shape index: {}]
  %s9 = inlined_call_operand.vmem [shape: f32[1,128], index: 9, kind: input, shape index: {}]
  %s10 = inlined_call_operand.hbm [shape: f32[8,128], index: 10, kind: output, shape index: {}]
  %s11 = sld [smem:[#allocation0]]
  $region70: #{tpu_custom_call.1} parent=0
    _
  %s13 = ssub.s32 1, %s11
  %s14 = scalar_select 0, %s13, %s11
  $region1: #{tpu_custom_call.1} parent=0
    #allocation2 [shape = 'u8[512]{0}', space=smem, size = 0x200, scoped, tag = 'input window, operand 2, single buffered']
    #allocation3 [shape = 's32[1]{0}', space=sflag, size = 0x4, scoped, tag = 'scoped memory for tpu_custom_call.1']
    #allocation4 [shape = 's32[1]{0}', space=sflag, size = 0x4, scoped, tag = 'scoped memory for tpu_custom_call.1']
    #allocation5 [shape = 's32[1]{0}', space=sflag, size = 0x4, scoped, tag = 'scoped memory for tpu_custom_call.1']
    #allocation6 [shape = 'u8[1024]{0}', space=smem, size = 0x400, scoped, tag = 'input window, operand 3, single buffered']
    #allocation7 [shape = 's32[1]{0}', space=sflag, size = 0x4, scoped, tag = 'scoped memory for tpu_custom_call.1']
    #allocation8 [shape = 'u8[512]{0}', space=vmem, size = 0x400, scoped, tag = 'input window, operand 5, single buffered']
    #allocation9 [shape = 'u8[98304]{0}', space=vmem, size = 0x18000, scoped, tag = 'input window, operand 6, single buffered']
    #allocation10 [shape = 's32[1]{0}', space=sflag, size = 0x4, scoped, tag = 'scoped memory for tpu_custom_call.1']
    #allocation11 [shape = 'u8[65536]{0}', space=vmem, size = 0x10000, scoped, tag = 'input window, operand 8, single buffered']
    #allocation12 [shape = 'u8[4096]{0}', space=vmem, size = 0x1000, scoped, tag = 'output window, operand 0, single buffered']
    %15 = vsyncpa [#allocation5], 0
    %16 = vsyncpa [#allocation7], 0
    %17 = vsyncpa [#allocation3], 0
    %18 = vsyncpa [#allocation10], 0
    %19 = vsyncpa [#allocation4], 0
    // Predicated region
    $region2: #{tpu_custom_call.1} parent=1 // pred_check
      _
    $region3: #{tpu_custom_call.1} parent=1 // pred_check_branch
      %21 = sbr.rel (0) target = $region5
    $region4: #{tpu_custom_call.1} parent=1 // pred_region
      _
    $region5: #{tpu_custom_call.1} parent=1 // pred_fallthru
      _
    // Predicated region
    $region6: #{tpu_custom_call.1} parent=1 // pred_check
      _
    $region7: #{tpu_custom_call.1} parent=1 // pred_check_branch
      %23 = sbr.rel (0) target = $region9
    $region8: #{tpu_custom_call.1} parent=1 // pred_region
      _
    $region9: #{tpu_custom_call.1} parent=1 // pred_fallthru
      _
    // Predicated region
    $region10: #{tpu_custom_call.1} parent=1 // pred_check
      _
    $region11: #{tpu_custom_call.1} parent=1 // pred_check_branch
      %25 = sbr.rel (0) target = $region13
    $region12: #{tpu_custom_call.1} parent=1 // pred_region
      %s27 = ssub.s32 16, 16
      %28 = vsyncadd [#allocation5], %s27
      %31 = dma.hbm_to_smem %s2, 16, [#allocation2], [#allocation5]
    $region13: #{tpu_custom_call.1} parent=1 // pred_fallthru
      _
    // Predicated region
    $region14: #{tpu_custom_call.1} parent=1 // pred_check
      _
    $region15: #{tpu_custom_call.1} parent=1 // pred_check_branch
      %33 = sbr.rel (0) target = $region17
    $region16: #{tpu_custom_call.1} parent=1 // pred_region
      %s35 = ssub.s32 32, 32
      %36 = vsyncadd [#allocation7], %s35
      %39 = dma.hbm_to_smem %s3, 32, [#allocation6], [#allocation7]
    $region17: #{tpu_custom_call.1} parent=1 // pred_fallthru
      _
    // Predicated region
    $region18: #{tpu_custom_call.1} parent=1 // pred_check
      _
    $region19: #{tpu_custom_call.1} parent=1 // pred_check_branch
      %41 = sbr.rel (0) target = $region21
    $region20: #{tpu_custom_call.1} parent=1 // pred_region
      _
    $region21: #{tpu_custom_call.1} parent=1 // pred_fallthru
      _
    // Predicated region
    $region22: #{tpu_custom_call.1} parent=1 // pred_check
      _
    $region23: #{tpu_custom_call.1} parent=1 // pred_check_branch
      %43 = sbr.rel (0) target = $region25
    $region24: #{tpu_custom_call.1} parent=1 // pred_region
      %s45 = ssub.s32 16, 16
      %46 = vsyncadd [#allocation3], %s45
      %s48 = sshll.u32 [#allocation8], 4
      %s49 = int_to_ptr.vmem [resolvable:$true] %s48
      %51 = dma.hbm_to_vmem [thread:$0]  %s5, 16, %s49, [#allocation3]
    $region25: #{tpu_custom_call.1} parent=1 // pred_fallthru
      _
    // Predicated region
    $region26: #{tpu_custom_call.1} parent=1 // pred_check
      _
    $region27: #{tpu_custom_call.1} parent=1 // pred_check_branch
      %53 = sbr.rel (0) target = $region29
    $region28: #{tpu_custom_call.1} parent=1 // pred_region
      %s55 = ssub.s32 3072, 3072
      %56 = vsyncadd [#allocation10], %s55
      %s57 = sshll.u32 [#allocation9], 4
      %s58 = int_to_ptr.vmem [resolvable:$true] %s57
      %63 = dma.hbm_to_vmem [thread:$0]  %s6, 3072, %s58, [#allocation10], 192, 192, 12
    $region29: #{tpu_custom_call.1} parent=1 // pred_fallthru
      _
    // Predicated region
    $region30: #{tpu_custom_call.1} parent=1 // pred_check
      _
    $region31: #{tpu_custom_call.1} parent=1 // pred_check_branch
      %65 = sbr.rel (0) target = $region33
    $region32: #{tpu_custom_call.1} parent=1 // pred_region
      _
    $region33: #{tpu_custom_call.1} parent=1 // pred_fallthru
      _
    // Predicated region
    $region34: #{tpu_custom_call.1} parent=1 // pred_check
      _
    $region35: #{tpu_custom_call.1} parent=1 // pred_check_branch
      %67 = sbr.rel (0) target = $region37
    $region36: #{tpu_custom_call.1} parent=1 // pred_region
      %s69 = ssub.s32 2048, 2048
      %70 = vsyncadd [#allocation10], %s69
      %s71 = sshll.u32 [#allocation11], 4
      %s72 = int_to_ptr.vmem [resolvable:$true] %s71
      %77 = dma.hbm_to_vmem [thread:$0]  %s8, 2048, %s72, [#allocation10], 64, 64, 4
    $region37: #{tpu_custom_call.1} parent=1 // pred_fallthru
      _
    // Predicated region
    $region38: #{tpu_custom_call.1} parent=1 // pred_check
      _
    $region39: #{tpu_custom_call.1} parent=1 // pred_check_branch
      %79 = sbr.rel (0) target = $region41
    $region40: #{tpu_custom_call.1} parent=1 // pred_region
      _
    $region41: #{tpu_custom_call.1} parent=1 // pred_fallthru
      _
    // Predicated region
    $region42: #{tpu_custom_call.1} parent=1 // pred_check
      _
    $region43: #{tpu_custom_call.1} parent=1 // pred_check_branch
      %81 = sbr.rel (0) target = $region45
    $region44: #{tpu_custom_call.1} parent=1 // pred_region
      %82 = dma.done [#allocation5], 16
    $region45: #{tpu_custom_call.1} parent=1 // pred_fallthru
      _
    // Predicated region
    $region46: #{tpu_custom_call.1} parent=1 // pred_check
      _
    $region47: #{tpu_custom_call.1} parent=1 // pred_check_branch
      %84 = sbr.rel (0) target = $region49
    $region48: #{tpu_custom_call.1} parent=1 // pred_region
      %85 = dma.done [#allocation7], 32
    $region49: #{tpu_custom_call.1} parent=1 // pred_fallthru
      _
    // Predicated region
    $region50: #{tpu_custom_call.1} parent=1 // pred_check
      _
    $region51: #{tpu_custom_call.1} parent=1 // pred_check_branch
      %87 = sbr.rel (0) target = $region53
    $region52: #{tpu_custom_call.1} parent=1 // pred_region
      %88 = dma.done [#allocation3], 16
    $region53: #{tpu_custom_call.1} parent=1 // pred_fallthru
      _
    // Predicated region
    $region54: #{tpu_custom_call.1} parent=1 // pred_check
      _
    $region55: #{tpu_custom_call.1} parent=1 // pred_check_branch
      %90 = sbr.rel (0) target = $region57
    $region56: #{tpu_custom_call.1} parent=1 // pred_region
      %91 = dma.done [#allocation10], 3072
    $region57: #{tpu_custom_call.1} parent=1 // pred_fallthru
      _
    // Predicated region
    $region58: #{tpu_custom_call.1} parent=1 // pred_check
      _
    $region59: #{tpu_custom_call.1} parent=1 // pred_check_branch
      %93 = sbr.rel (0) target = $region61
    $region60: #{tpu_custom_call.1} parent=1 // pred_region
      %94 = dma.done [#allocation10], 2048
    $region61: #{tpu_custom_call.1} parent=1 // pred_fallthru
      _
    %95 = sfence
    %v97 = vlaneseq
    %v98 = vshrl.u32 %v97, 7
    %s99 = smul.u32 0, 8
    %v100 = vstv %s99
    %v101 = vadd.s32 %v100, %v98
    %vm102 = vcmp.lt.s32.totalorder %v101, 8
    %v103 = vld [vmem:[%s0] sm:$0xff]
    %v104 = vpack.c.bf16 %v103, %v103
    %v105 = vld [vmem:[%s1] sm:$0xff]
    %v106 = vld [vmem:[%s4] sm:$0xf]
    %v107 = vld [vmem:[%s4 + $0x4] sm:$0xf]
    %v108 = vld [vmem:[#allocation8] sm:$0x1]
    %v110 = vlaneseq
    %v111 = vshrl.u32 %v110, 7
    %v112 = vsub.s32 0, %v111
    %v113 = vrot.slane %v108, %v112
    %v117 = vunpack.c.l.b16 %v106
    %v118 = vunpack.c.l.b16 %v107
    %v119 = vpack.c.b16 %v118, %v117
    %vm121 = vcmask 130048
    %v123 = vsel %vm121, %v104, 0
    %125 = vmatprep.subr.bf16.mxu0 0
    %126 = vmatpush1.bf16.msra.mxu0 0
    %127 = vmatprep.subr.bf16.mxu0 0
    %128 = vmatpush1.bf16.msra.mxu0 0
    %129 = vmatprep.subr.bf16.mxu0 0
    %130 = vmatpush1.bf16.msra.mxu0 0
    %131 = vmatprep.subr.bf16.mxu0 0
    %132 = vmatpush1.bf16.msra.mxu0 0
    %133 = vmatprep.subr.bf16.mxu0 0
    %134 = vmatpush1.bf16.msra.mxu0 0
    %135 = vmatprep.subr.bf16.mxu0 0
    %136 = vmatpush1.bf16.msra.mxu0 0
    %137 = vmatprep.subr.bf16.mxu0 0
    %138 = vmatpush1.bf16.msra.mxu0 0
    %139 = vmatprep.subr.bf16.mxu0 0
    %140 = vmatpush1.bf16.msra.mxu0 %v119
    %141 = vmatprep.subr.bf16.mxu0 0
    %142 = vmatpush2.bf16.msra.mxu0 0
    %143 = vmatprep.subr.bf16.mxu0 0
    %144 = vmatpush2.bf16.msra.mxu0 0
    %145 = vmatprep.subr.bf16.mxu0 0
    %146 = vmatpush2.bf16.msra.mxu0 0
    %147 = vmatprep.subr.bf16.mxu0 0
    %148 = vmatpush2.bf16.msra.mxu0 0
    %149 = vmatprep.subr.bf16.mxu0 0
    %150 = vmatpush2.bf16.msra.mxu0 0
    %151 = vmatprep.subr.bf16.mxu0 0
    %152 = vmatpush2.bf16.msra.mxu0 0
    %153 = vmatprep.subr.bf16.mxu0 0
    %154 = vmatpush2.bf16.msra.mxu0 0
    %155 = vmatprep.subr.bf16.mxu0 0
    %156 = vmatpush2.bf16.msra.mxu0 0
    %157 = vmatprep.mubr.bf16.mxu0 0
    %158 = vmatmul.mubr.bf16.gmra.mxu0 %v123
    %v159 = vpop.f32.mrf.mxu0
    %v160 = vadd.f32 %v113, %v159
    %v161 = vpop.f32.mrf.mxu0
    %v162 = vpop.f32.mrf.mxu0
    %v163 = vpop.f32.mrf.mxu0
    %164 = vdwg.mxu0
    %v165 = vmax.f32 %v160, 0.0
    %v166 = vpack.c.bf16 %v165, %v165
    %v167 = vld [vmem:[#allocation9] sm:$0xff]
    %v168 = vld [vmem:[#allocation9 + $0x8] sm:$0xf]
    %v169 = vld [vmem:[#allocation9 + $0xc] sm:$0xff]
    %v170 = vld [vmem:[#allocation9 + $0x14] sm:$0xf]
    %v171 = vld [vmem:[#allocation9 + $0x18] sm:$0xff]
    %v172 = vld [vmem:[#allocation9 + $0x20] sm:$0xf]
    %v173 = vld [vmem:[#allocation9 + $0x24] sm:$0xff]
    %v174 = vld [vmem:[#allocation9 + $0x2c] sm:$0xf]
    %v175 = vld [vmem:[#allocation9 + $0x30] sm:$0xff]
    %v176 = vld [vmem:[#allocation9 + $0x38] sm:$0xf]
    %v177 = vld [vmem:[#allocation9 + $0x3c] sm:$0xff]
    %v178 = vld [vmem:[#allocation9 + $0x44] sm:$0xf]
    %v179 = vld [vmem:[#allocation9 + $0x48] sm:$0xff]
    %v180 = vld [vmem:[#allocation9 + $0x50] sm:$0xf]
    %v181 = vld [vmem:[#allocation9 + $0x54] sm:$0xff]
    %v182 = vld [vmem:[#allocation9 + $0x5c] sm:$0xf]
    %v183 = vld [vmem:[#allocation9 + $0x60] sm:$0xff]
    %v184 = vld [vmem:[#allocation9 + $0x68] sm:$0xf]
    %v185 = vld [vmem:[#allocation9 + $0x6c] sm:$0xff]
    %v186 = vld [vmem:[#allocation9 + $0x74] sm:$0xf]
    %v187 = vld [vmem:[#allocation9 + $0x78] sm:$0xff]
    %v188 = vld [vmem:[#allocation9 + $0x80] sm:$0xf]
    %v189 = vld [vmem:[#allocation9 + $0x84] sm:$0xff]
    %v190 = vld [vmem:[#allocation9 + $0x8c] sm:$0xf]
    %v191 = vld [vmem:[#allocation9 + $0x90] sm:$0xff]
    %v192 = vld [vmem:[#allocation9 + $0x98] sm:$0xf]
    %v193 = vld [vmem:[#allocation9 + $0x9c] sm:$0xff]
    %v194 = vld [vmem:[#allocation9 + $0xa4] sm:$0xf]
    %v195 = vld [vmem:[#allocation9 + $0xa8] sm:$0xff]
    %v196 = vld [vmem:[#allocation9 + $0xb0] sm:$0xf]
    %v197 = vld [vmem:[#allocation9 + $0xb4] sm:$0xff]
    %v198 = vld [vmem:[#allocation9 + $0xbc] sm:$0xf]
    %v199 = vld [vmem:[%s7] sm:$0x7]
    %v201 = vlaneseq
    %v202 = vshrl.u32 %v201, 7
    %v203 = vsub.s32 0, %v202
    %v204 = vrot.slane %v199, %v203
    %v205 = vlaneseq
    %v206 = vshrl.u32 %v205, 7
    %v207 = vsub.s32 1, %v206
    %v208 = vrot.slane %v199, %v207
    %v209 = vlaneseq
    %v210 = vshrl.u32 %v209, 7
    %v211 = vsub.s32 2, %v210
    %v212 = vrot.slane %v199, %v211
    %v248 = vunpack.c.l.b16 %v167
    %v249 = vunpack.c.h.b16 %v167
    %v250 = vunpack.c.l.b16 %v168
    %v251 = vunpack.c.l.b16 %v169
    %v252 = vunpack.c.h.b16 %v169
    %v253 = vunpack.c.l.b16 %v170
    %v254 = vunpack.c.l.b16 %v171
    %v255 = vunpack.c.h.b16 %v171
    %v256 = vunpack.c.l.b16 %v172
    %v257 = vunpack.c.l.b16 %v173
    %v258 = vunpack.c.h.b16 %v173
    %v259 = vunpack.c.l.b16 %v174
    %v260 = vunpack.c.l.b16 %v175
    %v261 = vunpack.c.h.b16 %v175
    %v262 = vunpack.c.l.b16 %v176
    %v263 = vunpack.c.l.b16 %v177
    %v264 = vunpack.c.h.b16 %v177
    %v265 = vunpack.c.l.b16 %v178
    %v266 = vunpack.c.l.b16 %v179
    %v267 = vunpack.c.h.b16 %v179
    %v268 = vunpack.c.l.b16 %v180
    %v269 = vunpack.c.l.b16 %v181
    %v270 = vunpack.c.h.b16 %v181
    %v271 = vunpack.c.l.b16 %v182
    %v272 = vunpack.c.l.b16 %v183
    %v273 = vunpack.c.h.b16 %v183
    %v274 = vunpack.c.l.b16 %v184
    %v275 = vunpack.c.l.b16 %v185
    %v276 = vunpack.c.h.b16 %v185
    %v277 = vunpack.c.l.b16 %v186
    %v278 = vunpack.c.l.b16 %v187
    %v279 = vunpack.c.h.b16 %v187
    %v280 = vunpack.c.l.b16 %v188
    %v281 = vunpack.c.l.b16 %v189
    %v282 = vunpack.c.h.b16 %v189
    %v283 = vunpack.c.l.b16 %v190
    %v284 = vunpack.c.l.b16 %v191
    %v285 = vunpack.c.h.b16 %v191
    %v286 = vunpack.c.l.b16 %v192
    %v287 = vunpack.c.l.b16 %v193
    %v288 = vunpack.c.h.b16 %v193
    %v289 = vunpack.c.l.b16 %v194
    %v290 = vunpack.c.l.b16 %v195
    %v291 = vunpack.c.h.b16 %v195
    %v292 = vunpack.c.l.b16 %v196
    %v293 = vunpack.c.l.b16 %v197
    %v294 = vunpack.c.h.b16 %v197
    %v295 = vunpack.c.l.b16 %v198
    %v296 = vpack.c.b16 %v251, %v248
    %v297 = vpack.c.b16 %v252, %v249
    %v298 = vpack.c.b16 %v253, %v250
    %v299 = vpack.c.b16 %v257, %v254
    %v300 = vpack.c.b16 %v258, %v255
    %v301 = vpack.c.b16 %v259, %v256
    %v302 = vpack.c.b16 %v263, %v260
    %v303 = vpack.c.b16 %v264, %v261
    %v304 = vpack.c.b16 %v265, %v262
    %v305 = vpack.c.b16 %v269, %v266
    %v306 = vpack.c.b16 %v270, %v267
    %v307 = vpack.c.b16 %v271, %v268
    %v308 = vpack.c.b16 %v275, %v272
    %v309 = vpack.c.b16 %v276, %v273
    %v310 = vpack.c.b16 %v277, %v274
    %v311 = vpack.c.b16 %v281, %v278
    %v312 = vpack.c.b16 %v282, %v279
    %v313 = vpack.c.b16 %v283, %v280
    %v314 = vpack.c.b16 %v287, %v284
    %v315 = vpack.c.b16 %v288, %v285
    %v316 = vpack.c.b16 %v289, %v286
    %v317 = vpack.c.b16 %v293, %v290
    %v318 = vpack.c.b16 %v294, %v291
    %v319 = vpack.c.b16 %v295, %v292
    %344 = vmatprep.subr.bf16.mxu0 %v318
    %345 = vmatpush1.bf16.msra.mxu0 %v317
    %346 = vmatprep.subr.bf16.mxu0 %v315
    %347 = vmatpush1.bf16.msra.mxu0 %v314
    %348 = vmatprep.subr.bf16.mxu0 %v312
    %349 = vmatpush1.bf16.msra.mxu0 %v311
    %350 = vmatprep.subr.bf16.mxu0 %v309
    %351 = vmatpush1.bf16.msra.mxu0 %v308
    %352 = vmatprep.subr.bf16.mxu0 %v306
    %353 = vmatpush1.bf16.msra.mxu0 %v305
    %354 = vmatprep.subr.bf16.mxu0 %v303
    %355 = vmatpush1.bf16.msra.mxu0 %v302
    %356 = vmatprep.subr.bf16.mxu0 %v300
    %357 = vmatpush1.bf16.msra.mxu0 %v299
    %358 = vmatprep.subr.bf16.mxu0 %v297
    %359 = vmatpush1.bf16.msra.mxu0 %v296
    %360 = vmatprep.subr.bf16.mxu0 0
    %361 = vmatpush2.bf16.msra.mxu0 0
    %362 = vmatprep.subr.bf16.mxu0 0
    %363 = vmatpush2.bf16.msra.mxu0 0
    %364 = vmatprep.subr.bf16.mxu0 0
    %365 = vmatpush2.bf16.msra.mxu0 0
    %366 = vmatprep.subr.bf16.mxu0 0
    %367 = vmatpush2.bf16.msra.mxu0 0
    %368 = vmatprep.subr.bf16.mxu0 0
    %369 = vmatpush2.bf16.msra.mxu0 0
    %370 = vmatprep.subr.bf16.mxu0 0
    %371 = vmatpush2.bf16.msra.mxu0 0
    %372 = vmatprep.subr.bf16.mxu0 0
    %373 = vmatpush2.bf16.msra.mxu0 0
    %374 = vmatprep.subr.bf16.mxu0 0
    %375 = vmatpush2.bf16.msra.mxu0 0
    %376 = vmatprep.mubr.bf16.mxu0 0
    %377 = vmatmul.mubr.bf16.gmra.mxu0 %v166
    %v378 = vpop.f32.mrf.mxu0
    %v379 = vadd.f32 %v204, %v378
    %v380 = vpop.f32.mrf.mxu0
    %v381 = vadd.f32 %v208, %v380
    %v382 = vpop.f32.mrf.mxu0
    %v383 = vpop.f32.mrf.mxu0
    %384 = vdwg.mxu0
    %385 = vmatprep.subr.bf16.mxu0 0
    %386 = vmatpush1.bf16.msra.mxu0 %v319
    %387 = vmatprep.subr.bf16.mxu0 0
    %388 = vmatpush1.bf16.msra.mxu0 %v316
    %389 = vmatprep.subr.bf16.mxu0 0
    %390 = vmatpush1.bf16.msra.mxu0 %v313
    %391 = vmatprep.subr.bf16.mxu0 0
    %392 = vmatpush1.bf16.msra.mxu0 %v310
    %393 = vmatprep.subr.bf16.mxu0 0
    %394 = vmatpush1.bf16.msra.mxu0 %v307
    %395 = vmatprep.subr.bf16.mxu0 0
    %396 = vmatpush1.bf16.msra.mxu0 %v304
    %397 = vmatprep.subr.bf16.mxu0 0
    %398 = vmatpush1.bf16.msra.mxu0 %v301
    %399 = vmatprep.subr.bf16.mxu0 0
    %400 = vmatpush1.bf16.msra.mxu0 %v298
    %401 = vmatprep.subr.bf16.mxu0 0
    %402 = vmatpush2.bf16.msra.mxu0 0
    %403 = vmatprep.subr.bf16.mxu0 0
    %404 = vmatpush2.bf16.msra.mxu0 0
    %405 = vmatprep.subr.bf16.mxu0 0
    %406 = vmatpush2.bf16.msra.mxu0 0
    %407 = vmatprep.subr.bf16.mxu0 0
    %408 = vmatpush2.bf16.msra.mxu0 0
    %409 = vmatprep.subr.bf16.mxu0 0
    %410 = vmatpush2.bf16.msra.mxu0 0
    %411 = vmatprep.subr.bf16.mxu0 0
    %412 = vmatpush2.bf16.msra.mxu0 0
    %413 = vmatprep.subr.bf16.mxu0 0
    %414 = vmatpush2.bf16.msra.mxu0 0
    %415 = vmatprep.subr.bf16.mxu0 0
    %416 = vmatpush2.bf16.msra.mxu0 0
    %417 = vmatprep.mubr.bf16.mxu0 0
    %418 = vmatmul.mubr.bf16.gmra.mxu0 %v166
    %v419 = vpop.f32.mrf.mxu0
    %v420 = vadd.f32 %v212, %v419
    %v421 = vpop.f32.mrf.mxu0
    %v422 = vpop.f32.mrf.mxu0
    %v423 = vpop.f32.mrf.mxu0
    %424 = vdwg.mxu0
    %v425 = vmax.f32 %v379, 0.0
    %v426 = vmax.f32 %v381, 0.0
    %vm427 = vcmp.eq.s32.totalorder %v105, 1
    %s428 = sld [smem:[#allocation2]]
    %s429 = sld [smem:[#allocation2 + $0x1]]
    %431 = vrot.lane.b32.xlu0 %v420, 127
    %v432 = vpop.permute.xlu0 %431
    %v434 = vmax.f32 %v420, %v432
    %v435 = vsub.f32 %v420, %v434
    %v436 = vmul.f32 %v435, 1.442695
    %v437 = vpow.pop %v436
    %439 = vrot.lane.b32.xlu0 %v434, 1
    %v440 = vpop.permute.xlu0 %439
    %v442 = vsub.f32 %v420, %v440
    %v443 = vmul.f32 %v442, 1.442695
    %v444 = vpow.pop %v443
    %446 = vrot.lane.b32.xlu0 %v444, 127
    %v447 = vpop.permute.xlu0 %446
    %v449 = vadd.f32 %v437, %v447
    %v450 = vlog2.pop %v449
    %v451 = vmul.f32 %v450, 0.6931472
    %v452 = vadd.f32 %v434, %v451
    %454 = vrot.lane.b32.xlu0 %v452, 1
    %v455 = vpop.permute.xlu0 %454
    %v457 = vsub.f32 %v420, %v455
    %v458 = vsub.f32 %v420, %v452
    %460 = vrot.lane.b32.xlu0 %v457, 127
    %v461 = vpop.permute.xlu0 %460
    %v463 = vsel %vm427, %v461, %v458
    %v464 = vstv %s429
    %v465 = vstv %s428
    %v466 = vsel %vm427, %v464, %v465
    %v467 = vmul.f32 %v466, %v463
    %v468 = vsel %vm102, %v467, 0.0
    %vm469 = vcmask 7168
    %v470 = vsel %vm469, %v468, 0.0
    %471 = vadd.xlane.f32.xlu0 %v470
    %v472 = vpop.xlane.xlu0 %471
    %v473 = vrot.slane %v472, 4
    %v474 = vadd.f32 %v472, %v473
    %v475 = vrot.slane %v474, 2
    %v476 = vadd.f32 %v474, %v475
    %v477 = vrot.slane %v476, 1
    %v478 = vadd.f32 %v476, %v477
    %s479 = vtos %v478
    %v480 = vsel %vm102, %v466, 0.0
    %v481 = vsel %vm469, %v480, 0.0
    %482 = vadd.xlane.f32.xlu0 %v481
    %v483 = vpop.xlane.xlu0 %482
    %v484 = vrot.slane %v483, 4
    %v485 = vadd.f32 %v483, %v484
    %v486 = vrot.slane %v485, 2
    %v487 = vadd.f32 %v485, %v486
    %v488 = vrot.slane %v487, 1
    %v489 = vadd.f32 %v487, %v488
    %s490 = vtos %v489
    %s491 = ssub.f32 0.0, %s479
    %v492 = vpack.c.bf16 %v425, %v425
    %v493 = vpack.c.bf16 %v426, %v426
    %v494 = vld [vmem:[#allocation11] sm:$0xf]
    %v495 = vld [vmem:[#allocation11 + $0x4] sm:$0xf]
    %v496 = vld [vmem:[#allocation11 + $0x8] sm:$0xf]
    %v497 = vld [vmem:[#allocation11 + $0xc] sm:$0xf]
    %v498 = vld [vmem:[#allocation11 + $0x10] sm:$0xf]
    %v499 = vld [vmem:[#allocation11 + $0x14] sm:$0xf]
    %v500 = vld [vmem:[#allocation11 + $0x18] sm:$0xf]
    %v501 = vld [vmem:[#allocation11 + $0x1c] sm:$0xf]
    %v502 = vld [vmem:[#allocation11 + $0x20] sm:$0xf]
    %v503 = vld [vmem:[#allocation11 + $0x24] sm:$0xf]
    %v504 = vld [vmem:[#allocation11 + $0x28] sm:$0xf]
    %v505 = vld [vmem:[#allocation11 + $0x2c] sm:$0xf]
    %v506 = vld [vmem:[#allocation11 + $0x30] sm:$0xf]
    %v507 = vld [vmem:[#allocation11 + $0x34] sm:$0xf]
    %v508 = vld [vmem:[#allocation11 + $0x38] sm:$0xf]
    %v509 = vld [vmem:[#allocation11 + $0x3c] sm:$0xf]
    %v510 = vld [vmem:[#allocation11 + $0x40] sm:$0xf]
    %v511 = vld [vmem:[#allocation11 + $0x44] sm:$0xf]
    %v512 = vld [vmem:[#allocation11 + $0x48] sm:$0xf]
    %v513 = vld [vmem:[#allocation11 + $0x4c] sm:$0xf]
    %v514 = vld [vmem:[#allocation11 + $0x50] sm:$0xf]
    %v515 = vld [vmem:[#allocation11 + $0x54] sm:$0xf]
    %v516 = vld [vmem:[#allocation11 + $0x58] sm:$0xf]
    %v517 = vld [vmem:[#allocation11 + $0x5c] sm:$0xf]
    %v518 = vld [vmem:[#allocation11 + $0x60] sm:$0xf]
    %v519 = vld [vmem:[#allocation11 + $0x64] sm:$0xf]
    %v520 = vld [vmem:[#allocation11 + $0x68] sm:$0xf]
    %v521 = vld [vmem:[#allocation11 + $0x6c] sm:$0xf]
    %v522 = vld [vmem:[#allocation11 + $0x70] sm:$0xf]
    %v523 = vld [vmem:[#allocation11 + $0x74] sm:$0xf]
    %v524 = vld [vmem:[#allocation11 + $0x78] sm:$0xf]
    %v525 = vld [vmem:[#allocation11 + $0x7c] sm:$0xf]
    %v526 = vld [vmem:[%s9] sm:$0x1]
    %v528 = vlaneseq
    %v529 = vshrl.u32 %v528, 7
    %v530 = vsub.s32 0, %v529
    %v531 = vrot.slane %v526, %v530
    %v565 = vunpack.c.l.b16 %v494
    %v566 = vunpack.c.l.b16 %v495
    %v567 = vunpack.c.l.b16 %v496
    %v568 = vunpack.c.l.b16 %v497
    %v569 = vunpack.c.l.b16 %v498
    %v570 = vunpack.c.l.b16 %v499
    %v571 = vunpack.c.l.b16 %v500
    %v572 = vunpack.c.l.b16 %v501
    %v573 = vunpack.c.l.b16 %v502
    %v574 = vunpack.c.l.b16 %v503
    %v575 = vunpack.c.l.b16 %v504
    %v576 = vunpack.c.l.b16 %v505
    %v577 = vunpack.c.l.b16 %v506
    %v578 = vunpack.c.l.b16 %v507
    %v579 = vunpack.c.l.b16 %v508
    %v580 = vunpack.c.l.b16 %v509
    %v581 = vunpack.c.l.b16 %v510
    %v582 = vunpack.c.l.b16 %v511
    %v583 = vunpack.c.l.b16 %v512
    %v584 = vunpack.c.l.b16 %v513
    %v585 = vunpack.c.l.b16 %v514
    %v586 = vunpack.c.l.b16 %v515
    %v587 = vunpack.c.l.b16 %v516
    %v588 = vunpack.c.l.b16 %v517
    %v589 = vunpack.c.l.b16 %v518
    %v590 = vunpack.c.l.b16 %v519
    %v591 = vunpack.c.l.b16 %v520
    %v592 = vunpack.c.l.b16 %v521
    %v593 = vunpack.c.l.b16 %v522
    %v594 = vunpack.c.l.b16 %v523
    %v595 = vunpack.c.l.b16 %v524
    %v596 = vunpack.c.l.b16 %v525
    %v597 = vpack.c.b16 %v566, %v565
    %v598 = vpack.c.b16 %v568, %v567
    %v599 = vpack.c.b16 %v570, %v569
    %v600 = vpack.c.b16 %v572, %v571
    %v601 = vpack.c.b16 %v574, %v573
    %v602 = vpack.c.b16 %v576, %v575
    %v603 = vpack.c.b16 %v578, %v577
    %v604 = vpack.c.b16 %v580, %v579
    %v605 = vpack.c.b16 %v582, %v581
    %v606 = vpack.c.b16 %v584, %v583
    %v607 = vpack.c.b16 %v586, %v585
    %v608 = vpack.c.b16 %v588, %v587
    %v609 = vpack.c.b16 %v590, %v589
    %v610 = vpack.c.b16 %v592, %v591
    %v611 = vpack.c.b16 %v594, %v593
    %v612 = vpack.c.b16 %v596, %v595
    %629 = vmatprep.subr.bf16.mxu0 0
    %630 = vmatpush1.bf16.msra.mxu0 %v604
    %631 = vmatprep.subr.bf16.mxu0 0
    %632 = vmatpush1.bf16.msra.mxu0 %v603
    %633 = vmatprep.subr.bf16.mxu0 0
    %634 = vmatpush1.bf16.msra.mxu0 %v602
    %635 = vmatprep.subr.bf16.mxu0 0
    %636 = vmatpush1.bf16.msra.mxu0 %v601
    %637 = vmatprep.subr.bf16.mxu0 0
    %638 = vmatpush1.bf16.msra.mxu0 %v600
    %639 = vmatprep.subr.bf16.mxu0 0
    %640 = vmatpush1.bf16.msra.mxu0 %v599
    %641 = vmatprep.subr.bf16.mxu0 0
    %642 = vmatpush1.bf16.msra.mxu0 %v598
    %643 = vmatprep.subr.bf16.mxu0 0
    %644 = vmatpush1.bf16.msra.mxu0 %v597
    %645 = vmatprep.subr.bf16.mxu0 0
    %646 = vmatpush2.bf16.msra.mxu0 %v612
    %647 = vmatprep.subr.bf16.mxu0 0
    %648 = vmatpush2.bf16.msra.mxu0 %v611
    %649 = vmatprep.subr.bf16.mxu0 0
    %650 = vmatpush2.bf16.msra.mxu0 %v610
    %651 = vmatprep.subr.bf16.mxu0 0
    %652 = vmatpush2.bf16.msra.mxu0 %v609
    %653 = vmatprep.subr.bf16.mxu0 0
    %654 = vmatpush2.bf16.msra.mxu0 %v608
    %655 = vmatprep.subr.bf16.mxu0 0
    %656 = vmatpush2.bf16.msra.mxu0 %v607
    %657 = vmatprep.subr.bf16.mxu0 0
    %658 = vmatpush2.bf16.msra.mxu0 %v606
    %659 = vmatprep.subr.bf16.mxu0 0
    %660 = vmatpush2.bf16.msra.mxu0 %v605
    %661 = vmatprep.mubr.bf16.mxu0 %v493
    %662 = vmatmul.mubr.bf16.gmra.mxu0 %v492
    %v663 = vpop.f32.mrf.mxu0
    %v664 = vadd.f32 %v531, %v663
    %v665 = vpop.f32.mrf.mxu0
    %v666 = vpop.f32.mrf.mxu0
    %v667 = vpop.f32.mrf.mxu0
    %668 = vdwg.mxu0
    %vm669 = vcmp.eq.s32.totalorder %v105, 0
    %vm670 = vmand %vm102, %vm669
    %s671 = sld [smem:[#allocation6]]
    %s672 = sld [smem:[#allocation6 + $0x1]]
    %674 = vrot.lane.b32.xlu0 %v664, 127
    %v675 = vpop.permute.xlu0 %674
    %v677 = vmax.f32 %v664, %v675
    %v678 = vsub.f32 %v664, %v677
    %v679 = vmul.f32 %v678, 1.442695
    %v680 = vpow.pop %v679
    %682 = vrot.lane.b32.xlu0 %v677, 1
    %v683 = vpop.permute.xlu0 %682
    %v685 = vsub.f32 %v664, %v683
    %v686 = vmul.f32 %v685, 1.442695
    %v687 = vpow.pop %v686
    %689 = vrot.lane.b32.xlu0 %v687, 127
    %v690 = vpop.permute.xlu0 %689
    %v692 = vadd.f32 %v680, %v690
    %v693 = vlog2.pop %v692
    %v694 = vmul.f32 %v693, 0.6931472
    %v695 = vadd.f32 %v677, %v694
    %697 = vrot.lane.b32.xlu0 %v695, 1
    %v698 = vpop.permute.xlu0 %697
    %v700 = vsub.f32 %v664, %v698
    %v701 = vsub.f32 %v664, %v695
    %703 = vrot.lane.b32.xlu0 %v701, 1
    %v704 = vpop.permute.xlu0 %703
    %v706 = vsel %vm427, %v700, %v704
    %v707 = vstv %s672
    %v708 = vstv %s671
    %v709 = vsel %vm427, %v707, %v708
    %v710 = vmul.f32 %v709, %v706
    %712 = vrot.lane.b32.xlu0 %v710, 127
    %v713 = vpop.permute.xlu0 %712
    %v715 = vsel %vm670, %v713, 0.0
    %v716 = vsel %vm469, %v715, 0.0
    %717 = vadd.xlane.f32.xlu0 %v716
    %v718 = vpop.xlane.xlu0 %717
    %v719 = vrot.slane %v718, 4
    %v720 = vadd.f32 %v718, %v719
    %v721 = vrot.slane %v720, 2
    %v722 = vadd.f32 %v720, %v721
    %v723 = vrot.slane %v722, 1
    %v724 = vadd.f32 %v722, %v723
    %s725 = vtos %v724
    %727 = vrot.lane.b32.xlu0 %v709, 127
    %v728 = vpop.permute.xlu0 %727
    %v730 = vsel %vm670, %v728, 0.0
    %v731 = vsel %vm469, %v730, 0.0
    %732 = vadd.xlane.f32.xlu0 %v731
    %v733 = vpop.xlane.xlu0 %732
    %v734 = vrot.slane %v733, 4
    %v735 = vadd.f32 %v733, %v734
    %v736 = vrot.slane %v735, 2
    %v737 = vadd.f32 %v735, %v736
    %v738 = vrot.slane %v737, 1
    %v739 = vadd.f32 %v737, %v738
    %s740 = vtos %v739
    %s741 = ssub.f32 0.0, %s725
    %vm742 = vmand %vm102, %vm427
    %s743 = sld [smem:[#allocation6 + $0x80]]
    %s744 = sld [smem:[#allocation6 + $0x81]]
    %746 = vrot.lane.b32.xlu0 %v700, 126
    %v747 = vpop.permute.xlu0 %746
    %749 = vrot.lane.b32.xlu0 %v701, 127
    %v750 = vpop.permute.xlu0 %749
    %v752 = vsel %vm427, %v747, %v750
    %v753 = vstv %s744
    %v754 = vstv %s743
    %v755 = vsel %vm427, %v753, %v754
    %v756 = vmul.f32 %v755, %v752
    %758 = vrot.lane.b32.xlu0 %v756, 127
    %v759 = vpop.permute.xlu0 %758
    %v761 = vsel %vm742, %v759, 0.0
    %v762 = vsel %vm469, %v761, 0.0
    %763 = vadd.xlane.f32.xlu0 %v762
    %v764 = vpop.xlane.xlu0 %763
    %v765 = vrot.slane %v764, 4
    %v766 = vadd.f32 %v764, %v765
    %v767 = vrot.slane %v766, 2
    %v768 = vadd.f32 %v766, %v767
    %v769 = vrot.slane %v768, 1
    %v770 = vadd.f32 %v768, %v769
    %s771 = vtos %v770
    %773 = vrot.lane.b32.xlu0 %v755, 127
    %v774 = vpop.permute.xlu0 %773
    %v776 = vsel %vm742, %v774, 0.0
    %v777 = vsel %vm469, %v776, 0.0
    %778 = vadd.xlane.f32.xlu0 %v777
    %v779 = vpop.xlane.xlu0 %778
    %v780 = vrot.slane %v779, 4
    %v781 = vadd.f32 %v779, %v780
    %v782 = vrot.slane %v781, 2
    %v783 = vadd.f32 %v781, %v782
    %v784 = vrot.slane %v783, 1
    %v785 = vadd.f32 %v783, %v784
    %s786 = vtos %v785
    %s787 = ssub.f32 0.0, %s771
    %v788 = vlaneseq
    %v789 = vand.u32 %v788, 127
    %vm790 = vcmp.eq.s32.totalorder %v789, 0
    %v791 = vstv %s491
    %v792 = vsel %vm790, %v791, 0.0
    %vm793 = vcmp.eq.s32.totalorder %v789, 1
    %v794 = vstv %s490
    %v795 = vsel %vm793, %v794, %v792
    %vm796 = vcmp.eq.s32.totalorder %v789, 2
    %v797 = vstv %s741
    %v798 = vsel %vm796, %v797, %v795
    %vm799 = vcmp.eq.s32.totalorder %v789, 3
    %v800 = vstv %s740
    %v801 = vsel %vm799, %v800, %v798
    %vm802 = vcmp.eq.s32.totalorder %v789, 4
    %v803 = vstv %s787
    %v804 = vsel %vm802, %v803, %v801
    %vm805 = vcmp.eq.s32.totalorder %v789, 5
    %v806 = vstv %s786
    %v807 = vsel %vm805, %v806, %v804
    %vm808 = vcmp.eq.s32.totalorder %v98, 0
    %v809 = vsel %vm808, %v807, 0.0
    %810 = vst [vmem:[#allocation12] sm:$0xff] %v809
    // Predicated region
    $region62: #{tpu_custom_call.1} parent=1 // pred_check
      _
    $region63: #{tpu_custom_call.1} parent=1 // pred_check_branch
      %812 = sbr.rel (0) target = $region65
    $region64: #{tpu_custom_call.1} parent=1 // pred_region
      %s814 = ssub.s32 128, 128
      %815 = vsyncadd [#allocation4], %s814
      %s817 = sshll.u32 [#allocation12], 4
      %s818 = int_to_ptr.vmem [resolvable:$true] %s817
      %820 = dma.vmem_to_hbm [thread:$0]  %s818, 128, %s10, [#allocation4]
    $region65: #{tpu_custom_call.1} parent=1 // pred_fallthru
      _
    // Predicated region
    $region66: #{tpu_custom_call.1} parent=1 // pred_check
      _
    $region67: #{tpu_custom_call.1} parent=1 // pred_check_branch
      %822 = sbr.rel (0) target = $region69
    $region68: #{tpu_custom_call.1} parent=1 // pred_region
      %823 = dma.done [#allocation4], 128
    $region69: #{tpu_custom_call.1} parent=1 // pred_fallthru
      _
    %824 = vsyncpa [#allocation3], 1
    %825 = vsyncpa [#allocation10], 1
    %826 = vsyncpa [#allocation4], 1
    %827 = vsyncpa [#allocation5], 1
    %828 = vsyncpa [#allocation7], 1

</llo_original>
